<compile_context>
chip_gen: v7x
topology: tpu7x:2x2x1
jax: 0.10.0
libtpu: 0.0.40
codegen_flags: <defaults>
</compile_context>

<pallas_src>
import jax
import jax.numpy as jnp
from jax.experimental import pallas as pl
from jax.experimental.pallas import tpu as pltpu


# -----------------------------------------------------------------------------
# Per-generation tiling / VMEM budget helpers
# -----------------------------------------------------------------------------
def _vmem_budget_bytes():
    """Returns (per-hidden-block byte budget, scoped vmem_limit_bytes)."""
    cap = 0
    try:  # trace-time hardware query
        cap = int(getattr(pltpu.get_tpu_info(), "vmem_capacity_bytes", 0) or 0)
    except Exception:
        cap = 0
    if cap == 0:
        # Fallback keyed on device kind so 128 MiB-VMEM parts (v5e/v6e) do not
        # silently inherit the conservative v7x (64 MiB) tiling.
        try:
            kind = jax.devices()[0].device_kind.lower()
        except Exception:
            kind = ""
        if "v5" in kind or "v6" in kind:
            cap = 128 * 1024 * 1024
        else:
            cap = 64 * 1024 * 1024
    if cap >= 100 * 1024 * 1024:                  # v5e / v6e: 128 MiB physical
        return 24 * 1024 * 1024, 96 * 1024 * 1024
    return 8 * 1024 * 1024, 48 * 1024 * 1024      # v7x: 64 MiB physical


def _pick_s_tile(S, H, itemsize, block_budget):
    """Prefer the whole sequence per step (fattest per-step DMA); otherwise the
    largest 128-multiple tile that divides S and double-buffers in budget."""
    if 2 * S * H * itemsize <= block_budget or S % 128 != 0:
        return S
    best = 128
    for t in range(128, S + 1, 128):
        if S % t == 0 and 2 * t * H * itemsize <= block_budget:
            best = t
    return best


def _pick_b_tile(B, S_T, S, H, itemsize, block_budget):
    """When the whole sequence fits one step, block several batch rows per step
    so each grid step DMAs >= ~1 MiB (amortizes the ~0.35us fixed per-step
    cost; matters most at v7x's ~3.2 TB/s HBM bandwidth)."""
    if S_T != S:
        return 1
    target = 1 * 1024 * 1024
    per_row = S * H * itemsize
    best = 1
    for bt in range(1, B + 1):
        if B % bt:
            continue
        if 2 * bt * per_row > block_budget:
            break
        best = bt
        if bt * per_row >= target:
            break
    return best


# -----------------------------------------------------------------------------
# Pallas kernel: masked mean pooling + linear head + per-row MSE (fused)
# grid = (batch block, sequence tile); pooled-sum accumulator in VMEM scratch.
# -----------------------------------------------------------------------------
def _pool_head_mse_kernel(hidden_ref, mask_ref, inv_den_ref, w_ref, b_ref,
                          label_ref, out_ref, sse_ref, sum_acc):
    s = pl.program_id(1)

    @pl.when(s == 0)
    def _init():
        sum_acc[...] = jnp.zeros_like(sum_acc)

    # Masked sum over the sequence tile expressed as a per-row matmul -> MXU,
    # f32 accumulation keeps bf16 inputs numerically safe.
    sum_acc[...] += jnp.einsum("bos,bsh->boh", mask_ref[...], hidden_ref[...],
                               preferred_element_type=jnp.float32)

    @pl.when(s == pl.num_programs(1) - 1)
    def _epilogue():
        b_t = sum_acc.shape[0]
        # masked mean pooling (type_='mean'); 1/count precomputed in wrapper.
        pooled = (sum_acc[...] * inv_den_ref[...]).reshape(b_t, -1)  # (B_T, H)
        # K eval-mode dropout heads are identity, so averaging K identical
        # Linear outputs == a single Linear pass.
        logits = jnp.dot(pooled, w_ref[...].astype(jnp.float32),
                         preferred_element_type=jnp.float32) + b_ref[...]
        out_ref[...] = logits[:, None, :]                        # (B_T,1,O_PAD)
        # MSE partial: padded columns are (0 - 0) and contribute exactly 0.
        diff = logits - label_ref[...][:, 0, :]
        row_sse = jnp.sum(diff * diff, axis=-1, keepdims=True)   # (B_T, 1)
        sse_ref[...] = jnp.broadcast_to(row_sse[:, None, :], sse_ref.shape)


def pool_linear_mse(hidden, attention_mask, w_padded, b_padded, label):
    """hidden: (B,S,H) bf16 last_hidden_state; w_padded: (H,O_PAD) bf16;
    b_padded: (1,O_PAD) f32; label: (B,O) f32. Returns (logits (B,O), loss)."""
    hidden_bf = hidden.astype(jnp.bfloat16)       # no-op: encoder emits bf16
    B, S, H = hidden_bf.shape
    O = label.shape[-1]
    O_PAD = w_padded.shape[1]
    itemsize = hidden_bf.dtype.itemsize

    mask_bf = attention_mask.astype(jnp.bfloat16).reshape(B, 1, S)
    # Exact per-row 1/count, computed once on the tiny mask in the wrapper.
    den = jnp.maximum(attention_mask.astype(jnp.float32).sum(-1), 1e-9)
    inv_den = (1.0 / den).reshape(B, 1, 1)
    label_p = jnp.pad(label.astype(jnp.float32)[:, None, :],
                      ((0, 0), (0, 0), (0, O_PAD - O)))

    block_budget, vmem_limit = _vmem_budget_bytes()

    # Guard: non-128-multiple S whose full-S block busts the budget (realistic
    # only on v7x's 64 MiB VMEM) -> zero-pad the sequence so it can be tiled.
    # Zero mask rows contribute exactly 0 to the masked sum; den uses the
    # original mask, so semantics are unchanged.
    if S % 128 != 0 and 2 * S * H * itemsize > block_budget:
        s_pad = 128 * pl.cdiv(S, 128)
        hidden_bf = jnp.pad(hidden_bf, ((0, 0), (0, s_pad - S), (0, 0)))
        mask_bf = jnp.pad(mask_bf, ((0, 0), (0, 0), (0, s_pad - S)))
        S = s_pad

    S_T = _pick_s_tile(S, H, itemsize, block_budget)
    B_T = _pick_b_tile(B, S_T, S, H, itemsize, block_budget)
    grid = (B // B_T, S // S_T)

    # TODO(synk): with depth-2 buffering exposed-DMA at batch boundaries on
    # v7x, switch the hidden in_spec to pipeline_mode=pl.Buffered(3).
    out_p, sse = pl.pallas_call(
        _pool_head_mse_kernel,
        grid=grid,
        in_specs=[
            pl.BlockSpec((B_T, S_T, H), lambda b, s: (b, s, 0)),    # hidden
            pl.BlockSpec((B_T, 1, S_T), lambda b, s: (b, 0, s)),    # mask
            pl.BlockSpec((B_T, 1, 1), lambda b, s: (b, 0, 0)),      # 1/count
            pl.BlockSpec((H, O_PAD), lambda b, s: (0, 0)),          # W (resident)
            pl.BlockSpec((1, O_PAD), lambda b, s: (0, 0)),          # bias
            pl.BlockSpec((B_T, 1, O_PAD), lambda b, s: (b, 0, 0)),  # label
        ],
        out_specs=(
            pl.BlockSpec((B_T, 1, O_PAD), lambda b, s: (b, 0, 0)),  # logits
            pl.BlockSpec((B_T, 1, O_PAD), lambda b, s: (b, 0, 0)),  # row SSE
        ),
        out_shape=(
            jax.ShapeDtypeStruct((B, 1, O_PAD), jnp.float32),
            jax.ShapeDtypeStruct((B, 1, O_PAD), jnp.float32),
        ),
        scratch_shapes=[pltpu.VMEM((B_T, 1, H), jnp.float32)],      # pooled sum
        compiler_params=pltpu.CompilerParams(
            dimension_semantics=("parallel", "arbitrary"),
            vmem_limit_bytes=vmem_limit),
    )(hidden_bf, mask_bf, inv_den, w_padded, b_padded, label_p)

    out = out_p[:, 0, :O]
    # Cross-row combine of the in-kernel per-row SSE partials (scalar-sized).
    loss = jnp.sum(sse[:, 0, 0]) / jnp.float32(B * O)
    return out, loss


# -----------------------------------------------------------------------------
# Synthetic stand-in for the pretrained transformer encoder (plain JAX glue).
# TODO(synk): the HuggingFace AutoModel transformer stack has no in-script
# equivalent (pretrained weights); replaced by a deterministic embedding +
# layernorm encoder producing a (B, S, H) last_hidden_state.
# TODO(synk): with the real encoder, fuse the masked-sum pooling accumulate
# into its last layer so (B, S, H) never round-trips through HBM at all; this
# Pallas kernel then shrinks to the tiny (B,H)x(H,128) head + MSE epilogue.
# -----------------------------------------------------------------------------
def synthetic_encoder(params, input_ids, token_type_ids):
    word = params["word_emb"][input_ids]                 # (B, S, H)
    ttype = params["type_emb"][token_type_ids]           # (B, S, H)
    pos = params["pos_emb"][None, : input_ids.shape[1]]  # (1, S, H)
    x = word + ttype + pos
    mu = jnp.mean(x, axis=-1, keepdims=True)
    var = jnp.mean((x - mu) ** 2, axis=-1, keepdims=True)
    # Emit bf16 directly (cast fused into the layernorm output) so the (B,S,H)
    # tensor crosses HBM once at 2 B/elem instead of via a separate cast op.
    return ((x - mu) * jax.lax.rsqrt(var + 1e-12)).astype(jnp.bfloat16)


def init_params(key, vocab, n_types, max_len, hidden, out_size):
    k1, k2, k3, k4 = jax.random.split(key, 4)
    w_out = 0.02 * jax.random.normal(k4, (hidden, out_size), jnp.float32)
    b_out = jnp.zeros((out_size,), jnp.float32)
    o_pad = 128 * pl.cdiv(out_size, 128)
    return {
        "word_emb": 0.02 * jax.random.normal(k1, (vocab, hidden), jnp.float32),
        "type_emb": 0.02 * jax.random.normal(k2, (n_types, hidden), jnp.float32),
        "pos_emb": 0.02 * jax.random.normal(k3, (max_len, hidden), jnp.float32),
        "w_out": w_out,
        "b_out": b_out,
        # Lane-dense padded head built ONCE at init (hoisted out of forward).
        "w_out_padded": jnp.pad(w_out.astype(jnp.bfloat16),
                                ((0, 0), (0, o_pad - out_size))),
        "b_out_padded": jnp.pad(b_out[None, :],
                                ((0, 0), (0, o_pad - out_size))),
    }


@jax.jit
def base_model_forward(params, input_ids, attention_mask, token_type_ids,
                       label):
    hidden = synthetic_encoder(params, input_ids, token_type_ids)
    return pool_linear_mse(hidden, attention_mask, params["w_out_padded"],
                           params["b_out_padded"], label)


if __name__ == "__main__":
    B, S, H, O = 2, 8, 32, 6
    VOCAB, NTYPES = 100, 2
    key = jax.random.PRNGKey(0)
    kp, ki, kt, kl = jax.random.split(key, 4)

    params = init_params(kp, VOCAB, NTYPES, S, H, O)
    input_ids = jax.random.randint(ki, (B, S), 0, VOCAB, dtype=jnp.int32)
    token_type_ids = jax.random.randint(kt, (B, S), 0, NTYPES, dtype=jnp.int32)
    # valid lengths 6 and 4 -> exercise the mask in the pooling reduction
    attention_mask = jnp.array(
        [[1, 1, 1, 1, 1, 1, 0, 0],
         [1, 1, 1, 1, 0, 0, 0, 0]], dtype=jnp.int32)
    label = jax.random.normal(kl, (B, O), jnp.float32)

    out, loss = base_model_forward(params, input_ids, attention_mask,
                                   token_type_ids, label)
    jax.block_until_ready((out, loss))

    # pure-JAX reference with the same bf16 casts / f32 accumulation as the
    # kernel (tolerance loosened per the bf16-hidden change).
    hid = synthetic_encoder(params, input_ids, token_type_ids).astype(jnp.float32)
    m = attention_mask.astype(jnp.float32)
    inv = 1.0 / jnp.maximum(m.sum(1, keepdims=True), 1e-9)
    pooled = (hid * m[:, :, None]).sum(1) * inv
    w_bf = params["w_out"].astype(jnp.bfloat16).astype(jnp.float32)
    ref_out = pooled @ w_bf + params["b_out"]
    ref_loss = jnp.mean((ref_out - label) ** 2)
    assert jnp.allclose(out, ref_out, atol=1e-4, rtol=1e-4), "output mismatch"
    assert jnp.allclose(loss, ref_loss, atol=1e-4, rtol=1e-4), "loss mismatch"

    print("KERNEL_OK")
</pallas_src>

<mosaic_0001>
module attributes {stable_mosaic.version = 11 : i64} {
  func.func @_pool_head_mse_kernel(%arg0: i32, %arg1: i32, %arg2: memref<2x8x32xbf16, #tpu.memory_space<vmem>>, %arg3: memref<2x1x8xbf16, #tpu.memory_space<vmem>>, %arg4: memref<2x1x1xf32, #tpu.memory_space<vmem>>, %arg5: memref<32x128xbf16, #tpu.memory_space<vmem>>, %arg6: memref<1x128xf32, #tpu.memory_space<vmem>>, %arg7: memref<2x1x128xf32, #tpu.memory_space<vmem>>, %arg8: memref<2x1x128xf32, #tpu.memory_space<vmem>>, %arg9: memref<2x1x128xf32, #tpu.memory_space<vmem>>, %arg10: memref<2x1x32xf32, #tpu.memory_space<vmem>>) attributes {dimension_semantics = [#tpu.dimension_semantics<parallel>, #tpu.dimension_semantics<arbitrary>], iteration_bounds = array<i64: 1, 1>, scalar_prefetch = 0 : i64, scratch_operands = 1 : i64, tpu.core_type = #tpu.core_type<tc>, window_params = [{transform_indices = @transform_0, window_bounds = array<i64: 2, 8, 32>}, {transform_indices = @transform_1, window_bounds = array<i64: 2, 1, 8>}, {transform_indices = @transform_2, window_bounds = array<i64: 2, 1, 1>}, {pipeline_mode = #tpu.pipeline_mode<synchronous>, transform_indices = @transform_3, window_bounds = array<i64: 32, 128>}, {pipeline_mode = #tpu.pipeline_mode<synchronous>, transform_indices = @transform_4, window_bounds = array<i64: 1, 128>}, {transform_indices = @transform_5, window_bounds = array<i64: 2, 1, 128>}, {transform_indices = @transform_6, window_bounds = array<i64: 2, 1, 128>}, {transform_indices = @transform_7, window_bounds = array<i64: 2, 1, 128>}]} {
    %c0_i32 = arith.constant 0 : i32
    %0 = arith.cmpi eq, %arg1, %c0_i32 : i32
    %1 = arith.extui %0 : i1 to i32
    %c0_i32_0 = arith.constant 0 : i32
    %2 = arith.cmpi ne, %1, %c0_i32_0 : i32
    scf.if %2 {
      %cst_14 = arith.constant 0.000000e+00 : f32
      %12 = vector.broadcast %cst_14 : f32 to vector<2x1x32xf32>
      %c0_15 = arith.constant 0 : index
      %c0_16 = arith.constant 0 : index
      %c0_17 = arith.constant 0 : index
      %13 = vector.load %arg10[%c0_15, %c0_16, %c0_17] : memref<2x1x32xf32, #tpu.memory_space<vmem>>, vector<2x1x32xf32>
      tpu.vector_store %arg10[%c0_15, %c0_16, %c0_17], %12 {strides = array<i32>} : memref<2x1x32xf32, #tpu.memory_space<vmem>>, vector<2x1x32xf32>,
    } else {
    }
    %c0 = arith.constant 0 : index
    %c0_1 = arith.constant 0 : index
    %c0_2 = arith.constant 0 : index
    %3 = vector.load %arg10[%c0, %c0_1, %c0_2] : memref<2x1x32xf32, #tpu.memory_space<vmem>>, vector<2x1x32xf32>
    %c0_3 = arith.constant 0 : index
    %c0_4 = arith.constant 0 : index
    %c0_5 = arith.constant 0 : index
    %4 = vector.load %arg3[%c0_3, %c0_4, %c0_5] : memref<2x1x8xbf16, #tpu.memory_space<vmem>>, vector<2x1x8xbf16>
    %c0_6 = arith.constant 0 : index
    %c0_7 = arith.constant 0 : index
    %c0_8 = arith.constant 0 : index
    %5 = vector.load %arg2[%c0_6, %c0_7, %c0_8] : memref<2x8x32xbf16, #tpu.memory_space<vmem>>, vector<2x8x32xbf16>
    "tpu.trace_start"() <{level = 10 : i32, message = "bos,bsh->boh"}> : () -> ()
    %cst = arith.constant dense<0.000000e+00> : vector<2x1x32xf32>
    %6 = tpu.matmul %4, %5, %cst {dimension_numbers = #tpu.dot_dimension_numbers<[2], [1], [1], [2], [0, 0, 0, 1, 1, 2], [0], [0]>} : vector<2x1x8xbf16>, vector<2x8x32xbf16>, vector<2x1x32xf32> -> vector<2x1x32xf32>
    "tpu.trace_stop"() : () -> ()
    %7 = arith.addf %3, %6 : vector<2x1x32xf32>
    %c0_9 = arith.constant 0 : index
    %c0_10 = arith.constant 0 : index
    %c0_11 = arith.constant 0 : index
    %8 = vector.load %arg10[%c0_9, %c0_10, %c0_11] : memref<2x1x32xf32, #tpu.memory_space<vmem>>, vector<2x1x32xf32>
    tpu.vector_store %arg10[%c0_9, %c0_10, %c0_11], %7 {strides = array<i32>} : memref<2x1x32xf32, #tpu.memory_space<vmem>>, vector<2x1x32xf32>,
    %c0_i32_12 = arith.constant 0 : i32
    %9 = arith.cmpi eq, %arg1, %c0_i32_12 : i32
    %10 = arith.extui %9 : i1 to i32
    %c0_i32_13 = arith.constant 0 : i32
    %11 = arith.cmpi ne, %10, %c0_i32_13 : i32
    scf.if %11 {
      %c0_14 = arith.constant 0 : index
      %c0_15 = arith.constant 0 : index
      %c0_16 = arith.constant 0 : index
      %12 = vector.load %arg10[%c0_14, %c0_15, %c0_16] : memref<2x1x32xf32, #tpu.memory_space<vmem>>, vector<2x1x32xf32>
      %c0_17 = arith.constant 0 : index
      %c0_18 = arith.constant 0 : index
      %c0_19 = arith.constant 0 : index
      %13 = vector.load %arg4[%c0_17, %c0_18, %c0_19] : memref<2x1x1xf32, #tpu.memory_space<vmem>>, vector<2x1x1xf32>
      %14 = vector.broadcast %13 : vector<2x1x1xf32> to vector<2x1x32xf32>
      %15 = arith.mulf %12, %14 : vector<2x1x32xf32>
      %16 = vector.shape_cast %15 : vector<2x1x32xf32> to vector<2x32xf32>
      %c0_20 = arith.constant 0 : index
      %c0_21 = arith.constant 0 : index
      %17 = vector.load %arg5[%c0_20, %c0_21] : memref<32x128xbf16, #tpu.memory_space<vmem>>, vector<32x128xbf16>
      %18 = arith.extf %17 : vector<32x128xbf16> to vector<32x128xf32>
      %cst_22 = arith.constant dense<0.000000e+00> : vector<2x128xf32>
      %19 = tpu.matmul %16, %18, %cst_22 {dimension_numbers = #tpu.dot_dimension_numbers<[1], [0], [0], [1], [0, 0, 1, 1], [], []>} : vector<2x32xf32>, vector<32x128xf32>, vector<2x128xf32> -> vector<2x128xf32>
      %c0_23 = arith.constant 0 : index
      %c0_24 = arith.constant 0 : index
      %20 = vector.load %arg6[%c0_23, %c0_24] : memref<1x128xf32, #tpu.memory_space<vmem>>, vector<1x128xf32>
      %21 = vector.broadcast %20 : vector<1x128xf32> to vector<2x128xf32>
      %22 = arith.addf %19, %21 : vector<2x128xf32>
      %23 = vector.shape_cast %22 : vector<2x128xf32> to vector<2x1x128xf32>
      %c0_25 = arith.constant 0 : index
      %c0_26 = arith.constant 0 : index
      %c0_27 = arith.constant 0 : index
      %24 = vector.load %arg8[%c0_25, %c0_26, %c0_27] : memref<2x1x128xf32, #tpu.memory_space<vmem>>, vector<2x1x128xf32>
      tpu.vector_store %arg8[%c0_25, %c0_26, %c0_27], %23 {strides = array<i32>} : memref<2x1x128xf32, #tpu.memory_space<vmem>>, vector<2x1x128xf32>,
      %c0_28 = arith.constant 0 : index
      %c0_29 = arith.constant 0 : index
      %c0_30 = arith.constant 0 : index
      %25 = vector.load %arg7[%c0_28, %c0_29, %c0_30] : memref<2x1x128xf32, #tpu.memory_space<vmem>>, vector<2x1x128xf32>
      %26 = vector.shape_cast %25 : vector<2x1x128xf32> to vector<2x128xf32>
      %27 = arith.subf %22, %26 : vector<2x128xf32>
      %28 = arith.mulf %27, %27 : vector<2x128xf32>
      %cst_31 = arith.constant dense<0.000000e+00> : vector<2xf32>
      %29 = vector.multi_reduction <add>, %28, %cst_31 [1] : vector<2x128xf32> to vector<2xf32>
      %30 = vector.shape_cast %29 : vector<2xf32> to vector<2x1xf32>
      %31 = vector.shape_cast %30 : vector<2x1xf32> to vector<2x1x1xf32>
      %32 = vector.shape_cast %31 : vector<2x1x1xf32> to vector<2x1x1xf32>
      %33 = vector.broadcast %32 : vector<2x1x1xf32> to vector<2x1x128xf32>
      %c0_32 = arith.constant 0 : index
      %c0_33 = arith.constant 0 : index
      %c0_34 = arith.constant 0 : index
      %34 = vector.load %arg9[%c0_32, %c0_33, %c0_34] : memref<2x1x128xf32, #tpu.memory_space<vmem>>, vector<2x1x128xf32>
      tpu.vector_store %arg9[%c0_32, %c0_33, %c0_34], %33 {strides = array<i32>} : memref<2x1x128xf32, #tpu.memory_space<vmem>>, vector<2x1x128xf32>,
    } else {
    }
    return
  }
  func.func @transform_0(%arg0: i32, %arg1: i32) -> (i32, i32, i32) {
    %c0_i32 = arith.constant 0 : i32
    %c0_i32_0 = arith.constant 0 : i32
    return %arg0, %arg1, %c0_i32 : i32, i32, i32
  }
  func.func @transform_1(%arg0: i32, %arg1: i32) -> (i32, i32, i32) {
    %c0_i32 = arith.constant 0 : i32
    %c0_i32_0 = arith.constant 0 : i32
    return %arg0, %c0_i32, %arg1 : i32, i32, i32
  }
  func.func @transform_2(%arg0: i32, %arg1: i32) -> (i32, i32, i32) {
    %c0_i32 = arith.constant 0 : i32
    %c0_i32_0 = arith.constant 0 : i32
    %c0_i32_1 = arith.constant 0 : i32
    return %arg0, %c0_i32, %c0_i32_0 : i32, i32, i32
  }
  func.func @transform_3(%arg0: i32, %arg1: i32) -> (i32, i32) {
    %c0_i32 = arith.constant 0 : i32
    %c0_i32_0 = arith.constant 0 : i32
    %c0_i32_1 = arith.constant 0 : i32
    return %c0_i32, %c0_i32_0 : i32, i32
  }
  func.func @transform_4(%arg0: i32, %arg1: i32) -> (i32, i32) {
    %c0_i32 = arith.constant 0 : i32
    %c0_i32_0 = arith.constant 0 : i32
    %c0_i32_1 = arith.constant 0 : i32
    return %c0_i32, %c0_i32_0 : i32, i32
  }
  func.func @transform_5(%arg0: i32, %arg1: i32) -> (i32, i32, i32) {
    %c0_i32 = arith.constant 0 : i32
    %c0_i32_0 = arith.constant 0 : i32
    %c0_i32_1 = arith.constant 0 : i32
    return %arg0, %c0_i32, %c0_i32_0 : i32, i32, i32
  }
  func.func @transform_6(%arg0: i32, %arg1: i32) -> (i32, i32, i32) {
    %c0_i32 = arith.constant 0 : i32
    %c0_i32_0 = arith.constant 0 : i32
    %c0_i32_1 = arith.constant 0 : i32
    return %arg0, %c0_i32, %c0_i32_0 : i32, i32, i32
  }
  func.func @transform_7(%arg0: i32, %arg1: i32) -> (i32, i32, i32) {
    %c0_i32 = arith.constant 0 : i32
    %c0_i32_0 = arith.constant 0 : i32
    %c0_i32_1 = arith.constant 0 : i32
    return %arg0, %c0_i32, %c0_i32_0 : i32, i32, i32
  }
}

</mosaic_0001>

<llo_original>
// kernel: base_model_forward.1
$region0: #{base_model_forward.1}
  #allocation0 [shape = 'u32[]', space=smem, size = 0x4, offset = 0x4, fixed_abs, tag = 'smem constant byte address 0x4 - core index']
  #allocation1 [shape = 'u32[144,128]{1,0:T(1,128)}', space=vmem, size = 0x12000, scoped, tag = 'internal scratch']
  #allocation2 [shape = 'f32[2,1,32]{2,1,0:T(1,128)}', space=vmem, size = 0x400, scoped, tag = 'scratch operand']
  %s0 = inlined_call_operand.vmem [shape: bf16[2,8,32], index: 0, kind: input, shape index: {}]
  %s1 = inlined_call_operand.vmem [shape: bf16[2,1,8], index: 1, kind: input, shape index: {}]
  %s2 = inlined_call_operand.vmem [shape: f32[2,1,1], index: 2, kind: input, shape index: {}]
  %s3 = inlined_call_operand.vmem [shape: bf16[32,128], index: 3, kind: input, shape index: {}]
  %s4 = inlined_call_operand.vmem [shape: f32[1,128], index: 4, kind: input, shape index: {}]
  %s5 = inlined_call_operand.vmem [shape: f32[2,1,128], index: 5, kind: input, shape index: {}]
  %s6 = inlined_call_operand.hbm [shape: f32[2,1,128], index: 6, kind: output, shape index: {0}]
  %s7 = inlined_call_operand.vmem [shape: f32[2,1,128], index: 7, kind: output, shape index: {1}]
  %8 = xla_tuple %s6, %s7
  %s9 = sld [smem:[#allocation0]]
  $region50: #{base_model_forward.1} parent=0
    _
  %s11 = ssub.s32 1, %s9
  %s12 = scalar_select 0, %s11, %s9
  $region1: #{base_model_forward.1} parent=0
    #allocation3 [shape = 'u8[1024]{0}', space=vmem, size = 0x400, scoped, tag = 'output window, operand 0, single buffered']
    #allocation4 [shape = 's32[1]{0}', space=sflag, size = 0x4, scoped, tag = 'scoped memory for base_model_forward.1']
    %13 = vsyncpa [#allocation4], 0
    // Predicated region
    $region2: #{base_model_forward.1} parent=1 // pred_check
      _
    $region3: #{base_model_forward.1} parent=1 // pred_check_branch
      %15 = sbr.rel (0) target = $region5
    $region4: #{base_model_forward.1} parent=1 // pred_region
      _
    $region5: #{base_model_forward.1} parent=1 // pred_fallthru
      _
    // Predicated region
    $region6: #{base_model_forward.1} parent=1 // pred_check
      _
    $region7: #{base_model_forward.1} parent=1 // pred_check_branch
      %17 = sbr.rel (0) target = $region9
    $region8: #{base_model_forward.1} parent=1 // pred_region
      _
    $region9: #{base_model_forward.1} parent=1 // pred_fallthru
      _
    // Predicated region
    $region10: #{base_model_forward.1} parent=1 // pred_check
      _
    $region11: #{base_model_forward.1} parent=1 // pred_check_branch
      %19 = sbr.rel (0) target = $region13
    $region12: #{base_model_forward.1} parent=1 // pred_region
      _
    $region13: #{base_model_forward.1} parent=1 // pred_fallthru
      _
    // Predicated region
    $region14: #{base_model_forward.1} parent=1 // pred_check
      _
    $region15: #{base_model_forward.1} parent=1 // pred_check_branch
      %21 = sbr.rel (0) target = $region17
    $region16: #{base_model_forward.1} parent=1 // pred_region
      _
    $region17: #{base_model_forward.1} parent=1 // pred_fallthru
      _
    // Predicated region
    $region18: #{base_model_forward.1} parent=1 // pred_check
      _
    $region19: #{base_model_forward.1} parent=1 // pred_check_branch
      %23 = sbr.rel (0) target = $region21
    $region20: #{base_model_forward.1} parent=1 // pred_region
      _
    $region21: #{base_model_forward.1} parent=1 // pred_fallthru
      _
    // Predicated region
    $region22: #{base_model_forward.1} parent=1 // pred_check
      _
    $region23: #{base_model_forward.1} parent=1 // pred_check_branch
      %25 = sbr.rel (0) target = $region25
    $region24: #{base_model_forward.1} parent=1 // pred_region
      _
    $region25: #{base_model_forward.1} parent=1 // pred_fallthru
      _
    %p27 = scmp.eq.s32.totalorder 0, 0
    // Predicated region
    $region26: #{base_model_forward.1} parent=1 // pred_check
      %p28 = pneg %p27
    $region27: #{base_model_forward.1} parent=1 // pred_check_branch
      %30 = sbr.rel (%p28) target = $region29
    $region28: #{base_model_forward.1} parent=1 // pred_region
      %vm31 = vcmask 253952
      %32 = vst.msk [vmem:[#allocation2] sm:$0x1] %vm31, 0.0
      %33 = vst.msk [vmem:[#allocation2 + $0x1] sm:$0x1] %vm31, 0.0
    $region29: #{base_model_forward.1} parent=1 // pred_fallthru
      _
    %v34 = vld [vmem:[#allocation2] sm:$0x1]
    %v35 = vld [vmem:[#allocation2 + $0x1] sm:$0x1]
    %v36 = vld [vmem:[%s1] sm:$0x1]
    %v37 = vld [vmem:[%s1 + $0x1] sm:$0x1]
    %v38 = vld [vmem:[%s0] sm:$0xf]
    %v39 = vld [vmem:[%s0 + $0x4] sm:$0xf]
    %vm40 = vcmask 64512
    %v42 = vsel %vm40, %v36, 0
    %vm44 = vcmask 1043456
    %v46 = vsel %vm44, %v38, 0
    %48 = vmatprep.subr.bf16.mxu0 0
    %49 = vmatpush1.bf16.msra.mxu0 %v46
    %50 = vmatprep.subr.bf16.mxu0 0
    %51 = vmatpush1.bf16.msra.mxu0 0
    %52 = vmatprep.subr.bf16.mxu0 0
    %53 = vmatpush1.bf16.msra.mxu0 0
    %54 = vmatprep.subr.bf16.mxu0 0
    %55 = vmatpush1.bf16.msra.mxu0 0
    %56 = vmatprep.subr.bf16.mxu0 0
    %57 = vmatpush1.bf16.msra.mxu0 0
    %58 = vmatprep.subr.bf16.mxu0 0
    %59 = vmatpush1.bf16.msra.mxu0 0
    %60 = vmatprep.subr.bf16.mxu0 0
    %61 = vmatpush1.bf16.msra.mxu0 0
    %62 = vmatprep.subr.bf16.mxu0 0
    %63 = vmatpush1.bf16.msra.mxu0 0
    %64 = vmatprep.subr.bf16.mxu0 0
    %65 = vmatpush1.bf16.msra.mxu0 0
    %66 = vmatprep.subr.bf16.mxu0 0
    %67 = vmatpush1.bf16.msra.mxu0 0
    %68 = vmatprep.subr.bf16.mxu0 0
    %69 = vmatpush1.bf16.msra.mxu0 0
    %70 = vmatprep.subr.bf16.mxu0 0
    %71 = vmatpush1.bf16.msra.mxu0 0
    %72 = vmatprep.subr.bf16.mxu0 0
    %73 = vmatpush1.bf16.msra.mxu0 0
    %74 = vmatprep.subr.bf16.mxu0 0
    %75 = vmatpush1.bf16.msra.mxu0 0
    %76 = vmatprep.subr.bf16.mxu0 0
    %77 = vmatpush1.bf16.msra.mxu0 0
    %78 = vmatprep.subr.bf16.mxu0 0
    %79 = vmatpush1.bf16.msra.mxu0 0
    %80 = vmatprep.mubr.bf16.mxu0 0
    %81 = vmatmul.mubr.bf16.gmra.mrb[0].mxu0 %v42
    %v82 = vpop.f32.mrb[0].mxu0
    %v83 = vadd.f32 0.0, %v82
    %v84 = vpop.f32.mrb[0].mxu0
    %v85 = vpop.f32.mrb[0].mxu0
    %v86 = vpop.f32.mrb[0].mxu0
    %87 = vdwg.mxu0
    %v89 = vsel %vm40, %v37, 0
    %v92 = vsel %vm44, %v39, 0
    %94 = vmatprep.subr.bf16.mxu0 0
    %95 = vmatpush1.bf16.msra.mxu0 %v92
    %96 = vmatprep.subr.bf16.mxu0 0
    %97 = vmatpush1.bf16.msra.mxu0 0
    %98 = vmatprep.subr.bf16.mxu0 0
    %99 = vmatpush1.bf16.msra.mxu0 0
    %100 = vmatprep.subr.bf16.mxu0 0
    %101 = vmatpush1.bf16.msra.mxu0 0
    %102 = vmatprep.subr.bf16.mxu0 0
    %103 = vmatpush1.bf16.msra.mxu0 0
    %104 = vmatprep.subr.bf16.mxu0 0
    %105 = vmatpush1.bf16.msra.mxu0 0
    %106 = vmatprep.subr.bf16.mxu0 0
    %107 = vmatpush1.bf16.msra.mxu0 0
    %108 = vmatprep.subr.bf16.mxu0 0
    %109 = vmatpush1.bf16.msra.mxu0 0
    %110 = vmatprep.subr.bf16.mxu0 0
    %111 = vmatpush1.bf16.msra.mxu0 0
    %112 = vmatprep.subr.bf16.mxu0 0
    %113 = vmatpush1.bf16.msra.mxu0 0
    %114 = vmatprep.subr.bf16.mxu0 0
    %115 = vmatpush1.bf16.msra.mxu0 0
    %116 = vmatprep.subr.bf16.mxu0 0
    %117 = vmatpush1.bf16.msra.mxu0 0
    %118 = vmatprep.subr.bf16.mxu0 0
    %119 = vmatpush1.bf16.msra.mxu0 0
    %120 = vmatprep.subr.bf16.mxu0 0
    %121 = vmatpush1.bf16.msra.mxu0 0
    %122 = vmatprep.subr.bf16.mxu0 0
    %123 = vmatpush1.bf16.msra.mxu0 0
    %124 = vmatprep.subr.bf16.mxu0 0
    %125 = vmatpush1.bf16.msra.mxu0 0
    %126 = vmatprep.mubr.bf16.mxu0 0
    %127 = vmatmul.mubr.bf16.gmra.mrb[0].mxu0 %v89
    %v128 = vpop.f32.mrb[0].mxu0
    %v129 = vadd.f32 0.0, %v128
    %v130 = vpop.f32.mrb[0].mxu0
    %v131 = vpop.f32.mrb[0].mxu0
    %v132 = vpop.f32.mrb[0].mxu0
    %133 = vdwg.mxu0
    %v134 = vadd.f32 %v34, %v83
    %v135 = vadd.f32 %v35, %v129
    %vm136 = vcmask 253952
    %137 = vst.msk [vmem:[#allocation2] sm:$0x1] %vm136, %v134
    %138 = vst.msk [vmem:[#allocation2 + $0x1] sm:$0x1] %vm136, %v135
    // Predicated region
    $region30: #{base_model_forward.1} parent=1 // pred_check
      %p139 = pneg %p27
    $region31: #{base_model_forward.1} parent=1 // pred_check_branch
      %141 = sbr.rel (%p139) target = $region33
    $region32: #{base_model_forward.1} parent=1 // pred_region
      %v142 = vld [vmem:[#allocation2] sm:$0x1]
      %v143 = vld [vmem:[#allocation2 + $0x1] sm:$0x1]
      %v144 = vld [vmem:[%s2] sm:$0x1]
      %v145 = vld [vmem:[%s2 + $0x1] sm:$0x1]
      %147 = vset.pattern.permute.xlu0 0
      %148 = vperm.xlu0 %147, %v144
      %v149 = vpop.permute.xlu0 %148
      %v151 = vlaneseq
      %v152 = vshrl.u32 %v151, 7
      %v153 = vsub.s32 0, %v152
      %v154 = vrot.slane %v149, %v153
      %156 = vset.pattern.permute.xlu0 0
      %157 = vperm.xlu0 %156, %v145
      %v158 = vpop.permute.xlu0 %157
      %v160 = vlaneseq
      %v161 = vshrl.u32 %v160, 7
      %v162 = vsub.s32 0, %v161
      %v163 = vrot.slane %v158, %v162
      %v164 = vmul.f32 %v142, %v154
      %v165 = vmul.f32 %v143, %v163
      %v166 = vld [vmem:[%s3] sm:$0xf]
      %v167 = vld [vmem:[%s3 + $0x4] sm:$0xf]
      %v168 = vld [vmem:[%s3 + $0x8] sm:$0xf]
      %v169 = vld [vmem:[%s3 + $0xc] sm:$0xf]
      %v170 = vunpack.c.l.bf16 %v166
      %v171 = vunpack.c.l.bf16 %v167
      %v172 = vunpack.c.l.bf16 %v168
      %v173 = vunpack.c.l.bf16 %v169
      %v174 = vld [vmem:[%s4] sm:$0x1]
      %v176 = vlaneseq
      %v177 = vshrl.u32 %v176, 7
      %v178 = vsub.s32 0, %v177
      %v179 = vrot.slane %v174, %v178
      %v183 = vcombine.low %v164, %v165
      %v185 = vunpack.c.l.s4 1966171168
      %v186 = vunpack.c.0.s8 %v185
      %v187 = vlaneseq
      %v188 = vshrl.u32 %v187, 7
      %v189 = vsub.s32 %v186, %v188
      %v190 = vrot.slane %v183, %v189
      %v192 = vunpack.c.l.s4 1966171168
      %v193 = vunpack.c.0.s8 %v192
      %v194 = vlaneseq
      %v195 = vshrl.u32 %v194, 7
      %v196 = vsub.s32 %v193, %v195
      %v197 = vrot.slane %v190, %v196
      %vm198 = vcmask 261120
      %v199 = vsel %vm198, %v197, 0
      %201 = vmatprep.subr.mxu0 0.0
      %202 = vmatpush1.msra.mxu0 %v170
      %203 = vmatprep.subr.mxu0 0.0
      %204 = vmatpush1.msra.mxu0 %v171
      %205 = vmatprep.subr.mxu0 0.0
      %206 = vmatpush1.msra.mxu0 %v172
      %207 = vmatprep.subr.mxu0 0.0
      %208 = vmatpush1.msra.mxu0 %v173
      %209 = vmatprep.subr.mxu0 0.0
      %210 = vmatpush1.msra.mxu0 0.0
      %211 = vmatprep.subr.mxu0 0.0
      %212 = vmatpush1.msra.mxu0 0.0
      %213 = vmatprep.subr.mxu0 0.0
      %214 = vmatpush1.msra.mxu0 0.0
      %215 = vmatprep.subr.mxu0 0.0
      %216 = vmatpush1.msra.mxu0 0.0
      %217 = vmatprep.subr.mxu0 0.0
      %218 = vmatpush1.msra.mxu0 0.0
      %219 = vmatprep.subr.mxu0 0.0
      %220 = vmatpush1.msra.mxu0 0.0
      %221 = vmatprep.subr.mxu0 0.0
      %222 = vmatpush1.msra.mxu0 0.0
      %223 = vmatprep.subr.mxu0 0.0
      %224 = vmatpush1.msra.mxu0 0.0
      %225 = vmatprep.subr.mxu0 0.0
      %226 = vmatpush1.msra.mxu0 0.0
      %227 = vmatprep.subr.mxu0 0.0
      %228 = vmatpush1.msra.mxu0 0.0
      %229 = vmatprep.subr.mxu0 0.0
      %230 = vmatpush1.msra.mxu0 0.0
      %231 = vmatprep.subr.mxu0 0.0
      %232 = vmatpush1.msra.mxu0 0.0
      %233 = vmatprep.subr.mxu0 0.0
      %234 = vmatpush1.msra.mxu0 0.0
      %235 = vmatprep.subr.mxu0 0.0
      %236 = vmatpush1.msra.mxu0 0.0
      %237 = vmatprep.subr.mxu0 0.0
      %238 = vmatpush1.msra.mxu0 0.0
      %239 = vmatprep.subr.mxu0 0.0
      %240 = vmatpush1.msra.mxu0 0.0
      %241 = vmatprep.subr.mxu0 0.0
      %242 = vmatpush1.msra.mxu0 0.0
      %243 = vmatprep.subr.mxu0 0.0
      %244 = vmatpush1.msra.mxu0 0.0
      %245 = vmatprep.subr.mxu0 0.0
      %246 = vmatpush1.msra.mxu0 0.0
      %247 = vmatprep.subr.mxu0 0.0
      %248 = vmatpush1.msra.mxu0 0.0
      %249 = vmatprep.subr.mxu0 0.0
      %250 = vmatpush1.msra.mxu0 0.0
      %251 = vmatprep.subr.mxu0 0.0
      %252 = vmatpush1.msra.mxu0 0.0
      %253 = vmatprep.subr.mxu0 0.0
      %254 = vmatpush1.msra.mxu0 0.0
      %255 = vmatprep.subr.mxu0 0.0
      %256 = vmatpush1.msra.mxu0 0.0
      %257 = vmatprep.subr.mxu0 0.0
      %258 = vmatpush1.msra.mxu0 0.0
      %259 = vmatprep.subr.mxu0 0.0
      %260 = vmatpush1.msra.mxu0 0.0
      %261 = vmatprep.subr.mxu0 0.0
      %262 = vmatpush1.msra.mxu0 0.0
      %263 = vmatprep.subr.mxu0 0.0
      %264 = vmatpush1.msra.mxu0 0.0
      %265 = vmatprep.mubr.f32.mxu0 0.0
      %266 = vmatmul.mubr.f32.gmra.mrb[0].mxu0 %v199
      %v267 = vpop.f32.mrb[0].mxu0
      %v268 = vadd.f32 %v179, %v267
      %v269 = vpop.f32.mrb[0].mxu0
      %270 = vdwg.mxu0
      %v273 = vunpack.c.l.s4 1966171168
      %v274 = vunpack.c.0.s8 %v273
      %v275 = vlaneseq
      %v276 = vshrl.u32 %v275, 7
      %v277 = vsub.s32 %v274, %v276
      %v278 = vrot.slane %v268, %v277
      %v279 = vcombine.high %v278, %v278
      %v281 = vunpack.c.l.s4 1966171168
      %v282 = vunpack.c.0.s8 %v281
      %v283 = vlaneseq
      %v284 = vshrl.u32 %v283, 7
      %v285 = vsub.s32 %v282, %v284
      %v286 = vrot.slane %v278, %v285
      %v288 = vunpack.c.l.s4 1966171168
      %v289 = vunpack.c.0.s8 %v288
      %v290 = vlaneseq
      %v291 = vshrl.u32 %v290, 7
      %v292 = vsub.s32 %v289, %v291
      %v293 = vrot.slane %v279, %v292
      %296 = vst [vmem:[#allocation3] sm:$0x1] %v286
      %297 = vst [vmem:[#allocation3 + $0x1] sm:$0x1] %v293
      %v298 = vld [vmem:[%s5] sm:$0x1]
      %v299 = vld [vmem:[%s5 + $0x1] sm:$0x1]
      %v302 = vcombine.low %v298, %v299
      %v304 = vunpack.c.l.s4 1966171168
      %v305 = vunpack.c.0.s8 %v304
      %v306 = vlaneseq
      %v307 = vshrl.u32 %v306, 7
      %v308 = vsub.s32 %v305, %v307
      %v309 = vrot.slane %v302, %v308
      %v311 = vunpack.c.l.s4 1966171168
      %v312 = vunpack.c.0.s8 %v311
      %v313 = vlaneseq
      %v314 = vshrl.u32 %v313, 7
      %v315 = vsub.s32 %v312, %v314
      %v316 = vrot.slane %v309, %v315
      %v318 = vsub.f32 %v268, %v316
      %v319 = vmul.f32 %v318, %v318
      %vm320 = vcmask 1041408
      %v321 = vsel %vm320, %v319, 0.0
      %322 = vadd.xlane.f32.xlu0 %v321
      %v323 = vpop.xlane.xlu0 %322
      %v325 = vlaneseq
      %v326 = vshrl.u32 %v325, 7
      %v327 = vsub.s32 0, %v326
      %v328 = vrot.slane %v323, %v327
      %v329 = vlaneseq
      %v330 = vshrl.u32 %v329, 7
      %v331 = vsub.s32 1, %v330
      %v332 = vrot.slane %v323, %v331
      %335 = vst [vmem:[%s7] sm:$0x1] %v328
      %336 = vst [vmem:[%s7 + $0x1] sm:$0x1] %v332
    $region33: #{base_model_forward.1} parent=1 // pred_fallthru
      _
    // Predicated region
    $region34: #{base_model_forward.1} parent=1 // pred_check
      _
    $region35: #{base_model_forward.1} parent=1 // pred_check_branch
      %338 = sbr.rel (0) target = $region37
    $region36: #{base_model_forward.1} parent=1 // pred_region
      %s340 = ssub.s32 32, 32
      %341 = vsyncadd [#allocation4], %s340
      %s342 = sshll.u32 [#allocation3], 4
      %s343 = int_to_ptr.vmem [resolvable:$true] %s342
      %348 = dma.vmem_to_hbm [thread:$0]  %s343, 32, %s6, [#allocation4], 16, 16, 1
    $region37: #{base_model_forward.1} parent=1 // pred_fallthru
      _
    // Predicated region
    $region38: #{base_model_forward.1} parent=1 // pred_check
      _
    $region39: #{base_model_forward.1} parent=1 // pred_check_branch
      %350 = sbr.rel (0) target = $region41
    $region40: #{base_model_forward.1} parent=1 // pred_region
      _
    $region41: #{base_model_forward.1} parent=1 // pred_fallthru
      _
    // Predicated region
    $region42: #{base_model_forward.1} parent=1 // pred_check
      _
    $region43: #{base_model_forward.1} parent=1 // pred_check_branch
      %352 = sbr.rel (0) target = $region45
    $region44: #{base_model_forward.1} parent=1 // pred_region
      %353 = dma.done [#allocation4], 32
    $region45: #{base_model_forward.1} parent=1 // pred_fallthru
      _
    // Predicated region
    $region46: #{base_model_forward.1} parent=1 // pred_check
      _
    $region47: #{base_model_forward.1} parent=1 // pred_check_branch
      %355 = sbr.rel (0) target = $region49
    $region48: #{base_model_forward.1} parent=1 // pred_region
      _
    $region49: #{base_model_forward.1} parent=1 // pred_fallthru
      _
    %356 = vsyncpa [#allocation4], 1

</llo_original>
